<compile_context>
chip_gen: v6e
topology: v6e:2x2x1
jax: 0.10.0
libtpu: 0.0.40
codegen_flags: <defaults>
</compile_context>

<pallas_src>
import numpy as np
import jax
import jax.numpy as jnp
from jax.experimental import pallas as pl
from jax.experimental.pallas import tpu as pltpu


def _graph_linear_bias_kernel(x_ref, wt_ref, b_ref, o_ref):
    # x_ref:  (tile_m, in_size)   rows of the flattened input
    # wt_ref: (in_size, out_size) transposed weight (resident, same every step)
    # b_ref:  (1, out_size)       bias row (broadcast over tile_m)
    acc = jnp.dot(x_ref[...], wt_ref[...], preferred_element_type=jnp.float32)
    o_ref[...] = (acc + b_ref[...]).astype(o_ref.dtype)


def _graph_linear_nobias_kernel(x_ref, wt_ref, o_ref):
    o_ref[...] = jnp.dot(x_ref[...], wt_ref[...],
                         preferred_element_type=jnp.float32).astype(o_ref.dtype)


def graph_linear_forward(x, weight, bias=None, *, tile_m=256):
    """GraphLinear: affine transform of the last axis.

    x: (..., in_size) float array.
    weight: (out_size, in_size)   (PyTorch nn.Linear convention)
    bias:   (out_size,) or None
    Returns an array of shape (..., out_size).
    """
    *lead, in_size = x.shape
    out_size = weight.shape[0]
    m = int(np.prod(lead)) if lead else 1

    # Fold all leading dims into one row axis -> single big (M, K) @ (K, N).
    x2 = x.reshape(m, in_size)
    wt = jnp.transpose(weight)          # (in_size, out_size), lane-dense output

    # Row tile: large when M is large (amortizes per-step overhead, hides DMA),
    # otherwise just round M up to the sublane multiple of 8.
    if m >= tile_m:
        tm = tile_m
    else:
        tm = max(8, ((m + 7) // 8) * 8)
    m_pad = ((m + tm - 1) // tm) * tm
    if m_pad != m:
        x2 = jnp.pad(x2, ((0, m_pad - m), (0, 0)))

    grid = (m_pad // tm,)
    # TODO(synk): for very large in_size, add a K grid axis with an f32 VMEM
    # accumulator; at these sizes the full K fits comfortably in VMEM.
    x_spec = pl.BlockSpec((tm, in_size), lambda i: (i, 0))
    wt_spec = pl.BlockSpec((in_size, out_size), lambda i: (0, 0))
    out_spec = pl.BlockSpec((tm, out_size), lambda i: (i, 0))

    if bias is not None:
        b2 = bias.reshape(1, out_size)
        b_spec = pl.BlockSpec((1, out_size), lambda i: (0, 0))
        y = pl.pallas_call(
            _graph_linear_bias_kernel,
            out_shape=jax.ShapeDtypeStruct((m_pad, out_size), x.dtype),
            grid_spec=pltpu.PrefetchScalarGridSpec(
                num_scalar_prefetch=0,
                grid=grid,
                in_specs=[x_spec, wt_spec, b_spec],
                out_specs=out_spec,
            ),
            compiler_params=pltpu.CompilerParams(
                dimension_semantics=("parallel",)),
        )(x2, wt, b2)
    else:
        y = pl.pallas_call(
            _graph_linear_nobias_kernel,
            out_shape=jax.ShapeDtypeStruct((m_pad, out_size), x.dtype),
            grid_spec=pltpu.PrefetchScalarGridSpec(
                num_scalar_prefetch=0,
                grid=grid,
                in_specs=[x_spec, wt_spec],
                out_specs=out_spec,
            ),
            compiler_params=pltpu.CompilerParams(
                dimension_semantics=("parallel",)),
        )(x2, wt)

    y = y[:m]
    return y.reshape(*lead, out_size)


def _reference_forward(x, weight, bias):
    *lead, in_size = x.shape
    h = x.reshape(-1, in_size)
    h = h @ weight.T
    if bias is not None:
        h = h + bias
    return h.reshape(*lead, weight.shape[0])


if __name__ == "__main__":
    # 4-D input (the module explicitly supports "4-dim or whatever").
    batch, ch, nodes, in_size = 2, 4, 16, 16
    out_size = 32

    key = jax.random.PRNGKey(0)
    kx, kw, kb = jax.random.split(key, 3)
    x = jax.random.normal(kx, (batch, ch, nodes, in_size), dtype=jnp.float32)
    # Chainer-style i.i.d. Gaussian init for the linear layer.
    weight = 0.1 * jax.random.normal(kw, (out_size, in_size), dtype=jnp.float32)
    bias = 0.1 * jax.random.normal(kb, (out_size,), dtype=jnp.float32)

    out = graph_linear_forward(x, weight, bias)
    out = jax.block_until_ready(out)

    out_ref = _reference_forward(x, weight, bias)
    np.testing.assert_allclose(np.asarray(out), np.asarray(out_ref),
                               rtol=1e-5, atol=1e-5)
    assert out.shape == (batch, ch, nodes, out_size)

    print("KERNEL_OK")
</pallas_src>

<mosaic_0001>
module attributes {stable_mosaic.version = 11 : i64} {
  func.func @_graph_linear_bias_kernel(%arg0: i32, %arg1: memref<128x16xf32, #tpu.memory_space<vmem>>, %arg2: memref<16x32xf32, #tpu.memory_space<vmem>>, %arg3: memref<1x32xf32, #tpu.memory_space<vmem>>, %arg4: memref<128x32xf32, #tpu.memory_space<vmem>>) attributes {dimension_semantics = [#tpu.dimension_semantics<parallel>], iteration_bounds = array<i64: 1>, scalar_prefetch = 0 : i64, scratch_operands = 0 : i64, tpu.core_type = #tpu.core_type<tc>, window_params = [{transform_indices = @transform_0, window_bounds = array<i64: 128, 16>}, {pipeline_mode = #tpu.pipeline_mode<synchronous>, transform_indices = @transform_1, window_bounds = array<i64: 16, 32>}, {pipeline_mode = #tpu.pipeline_mode<synchronous>, transform_indices = @transform_2, window_bounds = array<i64: 1, 32>}, {transform_indices = @transform_3, window_bounds = array<i64: 128, 32>}]} {
    %c0 = arith.constant 0 : index
    %c0_0 = arith.constant 0 : index
    %0 = vector.load %arg1[%c0, %c0_0] : memref<128x16xf32, #tpu.memory_space<vmem>>, vector<128x16xf32>
    %c0_1 = arith.constant 0 : index
    %c0_2 = arith.constant 0 : index
    %1 = vector.load %arg2[%c0_1, %c0_2] : memref<16x32xf32, #tpu.memory_space<vmem>>, vector<16x32xf32>
    %cst = arith.constant dense<0.000000e+00> : vector<128x32xf32>
    %2 = tpu.matmul %0, %1, %cst {dimension_numbers = #tpu.dot_dimension_numbers<[1], [0], [0], [1], [0, 0, 1, 1], [], []>} : vector<128x16xf32>, vector<16x32xf32>, vector<128x32xf32> -> vector<128x32xf32>
    %c0_3 = arith.constant 0 : index
    %c0_4 = arith.constant 0 : index
    %3 = vector.load %arg3[%c0_3, %c0_4] : memref<1x32xf32, #tpu.memory_space<vmem>>, vector<1x32xf32>
    %4 = vector.broadcast %3 : vector<1x32xf32> to vector<128x32xf32>
    %5 = arith.addf %2, %4 : vector<128x32xf32>
    %c0_5 = arith.constant 0 : index
    %c0_6 = arith.constant 0 : index
    %6 = vector.load %arg4[%c0_5, %c0_6] : memref<128x32xf32, #tpu.memory_space<vmem>>, vector<128x32xf32>
    tpu.vector_store %arg4[%c0_5, %c0_6], %5 {strides = array<i32>} : memref<128x32xf32, #tpu.memory_space<vmem>>, vector<128x32xf32>,
    return
  }
  func.func @transform_0(%arg0: i32) -> (i32, i32) {
    %c0_i32 = arith.constant 0 : i32
    %c0_i32_0 = arith.constant 0 : i32
    return %arg0, %c0_i32 : i32, i32
  }
  func.func @transform_1(%arg0: i32) -> (i32, i32) {
    %c0_i32 = arith.constant 0 : i32
    %c0_i32_0 = arith.constant 0 : i32
    %c0_i32_1 = arith.constant 0 : i32
    return %c0_i32, %c0_i32_0 : i32, i32
  }
  func.func @transform_2(%arg0: i32) -> (i32, i32) {
    %c0_i32 = arith.constant 0 : i32
    %c0_i32_0 = arith.constant 0 : i32
    %c0_i32_1 = arith.constant 0 : i32
    return %c0_i32, %c0_i32_0 : i32, i32
  }
  func.func @transform_3(%arg0: i32) -> (i32, i32) {
    %c0_i32 = arith.constant 0 : i32
    %c0_i32_0 = arith.constant 0 : i32
    return %arg0, %c0_i32 : i32, i32
  }
}

</mosaic_0001>

<llo_original>
// kernel: tpu_custom_call.1
$region0: #{tpu_custom_call.1}
  #allocation0 [shape = 'u32[]', space=smem, size = 0x4, offset = 0x4, fixed_abs, tag = 'smem constant byte address 0x4 - core index']
  #allocation1 [shape = 'u32[144,128]{1,0:T(1,128)}', space=vmem, size = 0x12000, scoped, tag = 'internal scratch']
  %s0 = inlined_call_operand.vmem [shape: f32[128,16], index: 0, kind: input, shape index: {}]
  %s1 = inlined_call_operand.vmem [shape: f32[16,32], index: 1, kind: input, shape index: {}]
  %s2 = inlined_call_operand.vmem [shape: f32[1,32], index: 2, kind: input, shape index: {}]
  %s3 = inlined_call_operand.vmem [shape: f32[128,32], index: 3, kind: output, shape index: {}]
  %s4 = sld [smem:[#allocation0]]
  $region22: #{tpu_custom_call.1} parent=0
    _
  %s6 = ssub.s32 1, %s4
  %s7 = scalar_select 0, %s6, %s4
  // Predicated region
  $region2: #{tpu_custom_call.1} parent=0 // pred_check
    _
  $region3: #{tpu_custom_call.1} parent=0 // pred_check_branch
    %9 = sbr.rel (0) target = $region5
  $region4: #{tpu_custom_call.1} parent=0 // pred_region
    _
  $region5: #{tpu_custom_call.1} parent=0 // pred_fallthru
    _
  // Predicated region
  $region6: #{tpu_custom_call.1} parent=0 // pred_check
    _
  $region7: #{tpu_custom_call.1} parent=0 // pred_check_branch
    %11 = sbr.rel (0) target = $region9
  $region8: #{tpu_custom_call.1} parent=0 // pred_region
    _
  $region9: #{tpu_custom_call.1} parent=0 // pred_fallthru
    _
  // Predicated region
  $region10: #{tpu_custom_call.1} parent=0 // pred_check
    _
  $region11: #{tpu_custom_call.1} parent=0 // pred_check_branch
    %13 = sbr.rel (0) target = $region13
  $region12: #{tpu_custom_call.1} parent=0 // pred_region
    _
  $region13: #{tpu_custom_call.1} parent=0 // pred_fallthru
    _
  %v14 = vld [vmem:[%s0] sm:$0xff]
  %v15 = vld [vmem:[%s0 + $0x8] sm:$0xff]
  %v16 = vld [vmem:[%s0 + $0x10] sm:$0xff]
  %v17 = vld [vmem:[%s0 + $0x18] sm:$0xff]
  %v18 = vld [vmem:[%s0 + $0x20] sm:$0xff]
  %v19 = vld [vmem:[%s0 + $0x28] sm:$0xff]
  %v20 = vld [vmem:[%s0 + $0x30] sm:$0xff]
  %v21 = vld [vmem:[%s0 + $0x38] sm:$0xff]
  %v22 = vld [vmem:[%s0 + $0x40] sm:$0xff]
  %v23 = vld [vmem:[%s0 + $0x48] sm:$0xff]
  %v24 = vld [vmem:[%s0 + $0x50] sm:$0xff]
  %v25 = vld [vmem:[%s0 + $0x58] sm:$0xff]
  %v26 = vld [vmem:[%s0 + $0x60] sm:$0xff]
  %v27 = vld [vmem:[%s0 + $0x68] sm:$0xff]
  %v28 = vld [vmem:[%s0 + $0x70] sm:$0xff]
  %v29 = vld [vmem:[%s0 + $0x78] sm:$0xff]
  %v30 = vld [vmem:[%s1] sm:$0xff]
  %v31 = vld [vmem:[%s1 + $0x8] sm:$0xff]
  %v32 = vld [vmem:[%s2] sm:$0x1]
  %v34 = vlaneseq
  %v35 = vshrl.u32 %v34, 7
  %v36 = vsub.s32 0, %v35
  %v37 = vrot.slane %v32, %v36
  %vm39 = vcmask 130048
  %v41 = vsel %vm39, %v14, 0
  %v44 = vsel %vm39, %v15, 0
  %v47 = vsel %vm39, %v16, 0
  %v50 = vsel %vm39, %v17, 0
  %v53 = vsel %vm39, %v18, 0
  %v56 = vsel %vm39, %v19, 0
  %v59 = vsel %vm39, %v20, 0
  %v62 = vsel %vm39, %v21, 0
  %v65 = vsel %vm39, %v22, 0
  %v68 = vsel %vm39, %v23, 0
  %v71 = vsel %vm39, %v24, 0
  %v74 = vsel %vm39, %v25, 0
  %v77 = vsel %vm39, %v26, 0
  %v80 = vsel %vm39, %v27, 0
  %v83 = vsel %vm39, %v28, 0
  %v86 = vsel %vm39, %v29, 0
  %88 = vmatprep.subr.mxu0 0.0
  %89 = vmatpush1.msra.mxu0 0.0
  %90 = vmatprep.subr.mxu0 0.0
  %91 = vmatpush1.msra.mxu0 0.0
  %92 = vmatprep.subr.mxu0 0.0
  %93 = vmatpush1.msra.mxu0 0.0
  %94 = vmatprep.subr.mxu0 0.0
  %95 = vmatpush1.msra.mxu0 0.0
  %96 = vmatprep.subr.mxu0 0.0
  %97 = vmatpush1.msra.mxu0 0.0
  %98 = vmatprep.subr.mxu0 0.0
  %99 = vmatpush1.msra.mxu0 0.0
  %100 = vmatprep.subr.mxu0 0.0
  %101 = vmatpush1.msra.mxu0 0.0
  %102 = vmatprep.subr.mxu0 0.0
  %103 = vmatpush1.msra.mxu0 0.0
  %104 = vmatprep.subr.mxu0 0.0
  %105 = vmatpush1.msra.mxu0 0.0
  %106 = vmatprep.subr.mxu0 0.0
  %107 = vmatpush1.msra.mxu0 0.0
  %108 = vmatprep.subr.mxu0 0.0
  %109 = vmatpush1.msra.mxu0 0.0
  %110 = vmatprep.subr.mxu0 0.0
  %111 = vmatpush1.msra.mxu0 0.0
  %112 = vmatprep.subr.mxu0 0.0
  %113 = vmatpush1.msra.mxu0 0.0
  %114 = vmatprep.subr.mxu0 0.0
  %115 = vmatpush1.msra.mxu0 0.0
  %116 = vmatprep.subr.mxu0 0.0
  %117 = vmatpush1.msra.mxu0 %v31
  %118 = vmatprep.subr.mxu0 0.0
  %119 = vmatpush1.msra.mxu0 %v30
  %120 = vmatprep.subr.mxu0 0.0
  %121 = vmatpush2.msra.mxu0 0.0
  %122 = vmatprep.subr.mxu0 0.0
  %123 = vmatpush2.msra.mxu0 0.0
  %124 = vmatprep.subr.mxu0 0.0
  %125 = vmatpush2.msra.mxu0 0.0
  %126 = vmatprep.subr.mxu0 0.0
  %127 = vmatpush2.msra.mxu0 0.0
  %128 = vmatprep.subr.mxu0 0.0
  %129 = vmatpush2.msra.mxu0 0.0
  %130 = vmatprep.subr.mxu0 0.0
  %131 = vmatpush2.msra.mxu0 0.0
  %132 = vmatprep.subr.mxu0 0.0
  %133 = vmatpush2.msra.mxu0 0.0
  %134 = vmatprep.subr.mxu0 0.0
  %135 = vmatpush2.msra.mxu0 0.0
  %136 = vmatprep.subr.mxu0 0.0
  %137 = vmatpush2.msra.mxu0 0.0
  %138 = vmatprep.subr.mxu0 0.0
  %139 = vmatpush2.msra.mxu0 0.0
  %140 = vmatprep.subr.mxu0 0.0
  %141 = vmatpush2.msra.mxu0 0.0
  %142 = vmatprep.subr.mxu0 0.0
  %143 = vmatpush2.msra.mxu0 0.0
  %144 = vmatprep.subr.mxu0 0.0
  %145 = vmatpush2.msra.mxu0 0.0
  %146 = vmatprep.subr.mxu0 0.0
  %147 = vmatpush2.msra.mxu0 0.0
  %148 = vmatprep.subr.mxu0 0.0
  %149 = vmatpush2.msra.mxu0 0.0
  %150 = vmatprep.subr.mxu0 0.0
  %151 = vmatpush2.msra.mxu0 0.0
  %152 = vmatprep.mubr.f32.mxu0 0.0
  %153 = vmatmul.mubr.f32.gmra.mxu0 %v41
  %v154 = vpop.f32.mrf.mxu0
  %v155 = vadd.f32 %v37, %v154
  %v156 = vpop.f32.mrf.mxu0
  %157 = vmatprep.mubr.f32.mxu0 0.0
  %158 = vmatmul.mubr.f32.gmra.mxu0 %v44
  %v159 = vpop.f32.mrf.mxu0
  %v160 = vadd.f32 %v37, %v159
  %v161 = vpop.f32.mrf.mxu0
  %162 = vmatprep.mubr.f32.mxu0 0.0
  %163 = vmatmul.mubr.f32.gmra.mxu0 %v47
  %v164 = vpop.f32.mrf.mxu0
  %v165 = vadd.f32 %v37, %v164
  %v166 = vpop.f32.mrf.mxu0
  %167 = vmatprep.mubr.f32.mxu0 0.0
  %168 = vmatmul.mubr.f32.gmra.mxu0 %v50
  %v169 = vpop.f32.mrf.mxu0
  %v170 = vadd.f32 %v37, %v169
  %v171 = vpop.f32.mrf.mxu0
  %172 = vmatprep.mubr.f32.mxu0 0.0
  %173 = vmatmul.mubr.f32.gmra.mxu0 %v53
  %v174 = vpop.f32.mrf.mxu0
  %v175 = vadd.f32 %v37, %v174
  %v176 = vpop.f32.mrf.mxu0
  %177 = vmatprep.mubr.f32.mxu0 0.0
  %178 = vmatmul.mubr.f32.gmra.mxu0 %v56
  %v179 = vpop.f32.mrf.mxu0
  %v180 = vadd.f32 %v37, %v179
  %v181 = vpop.f32.mrf.mxu0
  %182 = vmatprep.mubr.f32.mxu0 0.0
  %183 = vmatmul.mubr.f32.gmra.mxu0 %v59
  %v184 = vpop.f32.mrf.mxu0
  %v185 = vadd.f32 %v37, %v184
  %v186 = vpop.f32.mrf.mxu0
  %187 = vmatprep.mubr.f32.mxu0 0.0
  %188 = vmatmul.mubr.f32.gmra.mxu0 %v62
  %v189 = vpop.f32.mrf.mxu0
  %v190 = vadd.f32 %v37, %v189
  %v191 = vpop.f32.mrf.mxu0
  %192 = vmatprep.mubr.f32.mxu0 0.0
  %193 = vmatmul.mubr.f32.gmra.mxu0 %v65
  %v194 = vpop.f32.mrf.mxu0
  %v195 = vadd.f32 %v37, %v194
  %v196 = vpop.f32.mrf.mxu0
  %197 = vmatprep.mubr.f32.mxu0 0.0
  %198 = vmatmul.mubr.f32.gmra.mxu0 %v68
  %v199 = vpop.f32.mrf.mxu0
  %v200 = vadd.f32 %v37, %v199
  %v201 = vpop.f32.mrf.mxu0
  %202 = vmatprep.mubr.f32.mxu0 0.0
  %203 = vmatmul.mubr.f32.gmra.mxu0 %v71
  %v204 = vpop.f32.mrf.mxu0
  %v205 = vadd.f32 %v37, %v204
  %v206 = vpop.f32.mrf.mxu0
  %207 = vmatprep.mubr.f32.mxu0 0.0
  %208 = vmatmul.mubr.f32.gmra.mxu0 %v74
  %v209 = vpop.f32.mrf.mxu0
  %v210 = vadd.f32 %v37, %v209
  %v211 = vpop.f32.mrf.mxu0
  %212 = vmatprep.mubr.f32.mxu0 0.0
  %213 = vmatmul.mubr.f32.gmra.mxu0 %v77
  %v214 = vpop.f32.mrf.mxu0
  %v215 = vadd.f32 %v37, %v214
  %v216 = vpop.f32.mrf.mxu0
  %217 = vmatprep.mubr.f32.mxu0 0.0
  %218 = vmatmul.mubr.f32.gmra.mxu0 %v80
  %v219 = vpop.f32.mrf.mxu0
  %v220 = vadd.f32 %v37, %v219
  %v221 = vpop.f32.mrf.mxu0
  %222 = vmatprep.mubr.f32.mxu0 0.0
  %223 = vmatmul.mubr.f32.gmra.mxu0 %v83
  %v224 = vpop.f32.mrf.mxu0
  %v225 = vadd.f32 %v37, %v224
  %v226 = vpop.f32.mrf.mxu0
  %227 = vmatprep.mubr.f32.mxu0 0.0
  %228 = vmatmul.mubr.f32.gmra.mxu0 %v86
  %v229 = vpop.f32.mrf.mxu0
  %v230 = vadd.f32 %v37, %v229
  %v231 = vpop.f32.mrf.mxu0
  %232 = vdwg.mxu0
  %vm233 = vcmask 261120
  %234 = vst.msk [vmem:[%s3] sm:$0xff] %vm233, %v155
  %235 = vst.msk [vmem:[%s3 + $0x8] sm:$0xff] %vm233, %v160
  %236 = vst.msk [vmem:[%s3 + $0x10] sm:$0xff] %vm233, %v165
  %237 = vst.msk [vmem:[%s3 + $0x18] sm:$0xff] %vm233, %v170
  %238 = vst.msk [vmem:[%s3 + $0x20] sm:$0xff] %vm233, %v175
  %239 = vst.msk [vmem:[%s3 + $0x28] sm:$0xff] %vm233, %v180
  %240 = vst.msk [vmem:[%s3 + $0x30] sm:$0xff] %vm233, %v185
  %241 = vst.msk [vmem:[%s3 + $0x38] sm:$0xff] %vm233, %v190
  %242 = vst.msk [vmem:[%s3 + $0x40] sm:$0xff] %vm233, %v195
  %243 = vst.msk [vmem:[%s3 + $0x48] sm:$0xff] %vm233, %v200
  %244 = vst.msk [vmem:[%s3 + $0x50] sm:$0xff] %vm233, %v205
  %245 = vst.msk [vmem:[%s3 + $0x58] sm:$0xff] %vm233, %v210
  %246 = vst.msk [vmem:[%s3 + $0x60] sm:$0xff] %vm233, %v215
  %247 = vst.msk [vmem:[%s3 + $0x68] sm:$0xff] %vm233, %v220
  %248 = vst.msk [vmem:[%s3 + $0x70] sm:$0xff] %vm233, %v225
  %249 = vst.msk [vmem:[%s3 + $0x78] sm:$0xff] %vm233, %v230
  // Predicated region
  $region14: #{tpu_custom_call.1} parent=0 // pred_check
    _
  $region15: #{tpu_custom_call.1} parent=0 // pred_check_branch
    %251 = sbr.rel (0) target = $region17
  $region16: #{tpu_custom_call.1} parent=0 // pred_region
    _
  $region17: #{tpu_custom_call.1} parent=0 // pred_fallthru
    _
  // Predicated region
  $region18: #{tpu_custom_call.1} parent=0 // pred_check
    _
  $region19: #{tpu_custom_call.1} parent=0 // pred_check_branch
    %253 = sbr.rel (0) target = $region21
  $region20: #{tpu_custom_call.1} parent=0 // pred_region
    _
  $region21: #{tpu_custom_call.1} parent=0 // pred_fallthru
    _

</llo_original>
